<compile_context>
chip_gen: v5e
topology: v5e:2x2
jax: 0.10.0
libtpu: 0.0.40
codegen_flags: <defaults>
</compile_context>

<pallas_src>
import jax
import jax.numpy as jnp
from jax.experimental import pallas as pl
from jax.experimental.pallas import tpu as pltpu


# ---------------------------------------------------------------------------
# One-shot probe of pltpu.roll's shift convention (runs a tiny kernel once).
# ---------------------------------------------------------------------------
def _probe_roll_shifts_forward():
    """True iff pltpu.roll(x, s, axis)[i] == x[(i - s) % n] (jnp.roll style)."""
    def probe(x_ref, o_ref):
        o_ref[...] = pltpu.roll(x_ref[...], 1, 0)

    x = jax.lax.broadcasted_iota(jnp.float32, (8, 128), 0)
    y = pl.pallas_call(
        probe, out_shape=jax.ShapeDtypeStruct((8, 128), jnp.float32))(x)
    return bool(jax.device_get(y)[1, 0] == 0.0)


_ROLL_SHIFTS_FORWARD = _probe_roll_shifts_forward()


# ---------------------------------------------------------------------------
# Weight repacking (tiny, pure-JAX, done in the wrapper)
# ---------------------------------------------------------------------------
def _banded_2d_mats_k(w_hwio, W):
    """(3, 3, F, F) HWIO -> (3*W*F, W*F).

    For each ky, M_ky[win*F+fi, wout*F+fo] = w[ky, kx, fi, fo] with
    kx = win - wout + 1 (zero outside the band) so one matmul applies all kx
    taps with the W zero-padding built in.  The three ky mats are stacked
    along K so a conv becomes a single (M, 3*WF) @ (3*WF, WF) dot."""
    mats = []
    for ky in range(3):
        m = None
        for kx in range(3):
            shift = jnp.eye(W, k=-(kx - 1), dtype=jnp.float32)
            term = jnp.kron(shift, w_hwio[ky, kx].astype(jnp.float32))
            m = term if m is None else m + term
        mats.append(m)
    return jnp.concatenate(mats, axis=0)                     # (3*WF, WF)


def _blockdiag_c_mats_k(w3, W):
    """(3, F, F) -> (3*W*F, W*F): block-diagonal per spectral tap, stacked on K."""
    eye = jnp.eye(W, dtype=jnp.float32)
    return jnp.concatenate(
        [jnp.kron(eye, w3[dc].astype(jnp.float32)) for dc in range(3)], axis=0)


# ---------------------------------------------------------------------------
# Fused Layer kernel: one block of B samples, flattened to (M, WF) rows
# ---------------------------------------------------------------------------
def _make_layer_kernel(B, C, H, WF, roll_forward):
    M = B * C * H           # rows fed to the MXU
    CH = C * H              # rows per sample

    def kernel(x_ref, mats_ref, bias_ref, o_ref):
        # x_ref    : (B, C, H, WF) lane-dense block
        # mats_ref : (4, 3*WF, WF) [conv2d_a, conv2d_b, conv3d_a, conv3d_b],
        #            per-tap weight mats pre-stacked along K
        # bias_ref : (4, WF)       biases tiled across W

        # Destination-row halo masks (computed once; wrap rows of the rolls
        # below get zeroed — this replaces the padded scratches entirely).
        r = jax.lax.broadcasted_iota(jnp.int32, (M, WF), 0)
        h = r % H
        c = r % CH
        top_h, bot_h = h == 0, h == H - 1          # spatial (H) halo rows
        top_c, bot_c = c < H, c >= CH - H          # spectral (C) halo slabs

        def shifted(y, shift):
            # (view_up[r] = y[r - shift], view_dn[r] = y[r + shift]), cyclic;
            # the wrapped rows are masked to zero by the caller.
            s_up = shift if roll_forward else M - shift
            s_dn = M - shift if roll_forward else shift
            return pltpu.roll(y, s_up, 0), pltpu.roll(y, s_dn, 0)

        def conv(y, idx, shift, top, bot, relu):
            # 3-tap conv (along H when shift=1, along C when shift=H) as a
            # single MXU matmul with K = 3*WF.
            up, dn = shifted(y, shift)
            up = jnp.where(top, 0.0, up)           # zero-pad "previous" row
            dn = jnp.where(bot, 0.0, dn)           # zero-pad "next" row
            lhs = jnp.concatenate([up, y, dn], axis=1)        # (M, 3*WF)
            acc = jnp.dot(lhs, mats_ref[idx],
                          preferred_element_type=jnp.float32)
            acc = acc + bias_ref[idx:idx + 1, :]
            return jnp.maximum(acc, 0.0) if relu else acc

        x = x_ref[...].reshape(M, WF).astype(jnp.float32)
        t = conv(x, 0, 1, top_h, bot_h, True)
        out1 = conv(t, 1, 1, top_h, bot_h, False) + x          # layer1(x) + x
        t = conv(out1, 2, H, top_c, bot_c, True)
        out2 = conv(t, 3, H, top_c, bot_c, False) + out1       # layer3(o1) + o1
        o_ref[...] = out2.reshape(B, C, H, WF).astype(o_ref.dtype)

    return kernel


# ---------------------------------------------------------------------------
# Parameters (deterministic init) and full Layer forward
# ---------------------------------------------------------------------------
def init_layer_params(key, n_feats):
    F = n_feats
    keys = jax.random.split(key, 8)

    def u(k, shape, fan_in):
        bound = 1.0 / jnp.sqrt(jnp.float32(fan_in))
        return jax.random.uniform(k, shape, jnp.float32, -bound, bound)

    return {
        # DoubleConv2DFeatsDim: two Conv2d(F, F, 3x3), weights stored HWIO.
        "w2d_a": u(keys[0], (3, 3, F, F), F * 9),
        "b2d_a": u(keys[1], (F,), F * 9),
        "w2d_b": u(keys[2], (3, 3, F, F), F * 9),
        "b2d_b": u(keys[3], (F,), F * 9),
        # DoubleConv3DChannelDim: two Conv3d(F, F, (3,1,1)), stored (3, Fin, Fout).
        "w3d_a": u(keys[4], (3, F, F), F * 3),
        "b3d_a": u(keys[5], (F,), F * 3),
        "w3d_b": u(keys[6], (3, F, F), F * 3),
        "b3d_b": u(keys[7], (F,), F * 3),
    }


def layer_forward(params, x):
    """x: (N, F, C, H, W) -> (N, F, C, H, W); matches PyTorch Layer.forward."""
    N, F, C, H, W = x.shape
    WF = W * F

    # (N, F, C, H, W) -> lane-dense (N, C, H, W*F)
    x_r = jnp.transpose(x, (0, 2, 3, 4, 1)).reshape(N, C, H, WF)

    mats = jnp.stack([
        _banded_2d_mats_k(params["w2d_a"], W),
        _banded_2d_mats_k(params["w2d_b"], W),
        _blockdiag_c_mats_k(params["w3d_a"], W),
        _blockdiag_c_mats_k(params["w3d_b"], W),
    ])                                                       # (4, 3*WF, WF)
    biases = jnp.stack([
        jnp.tile(params["b2d_a"].astype(jnp.float32), W),
        jnp.tile(params["b2d_b"].astype(jnp.float32), W),
        jnp.tile(params["b3d_a"].astype(jnp.float32), W),
        jnp.tile(params["b3d_b"].astype(jnp.float32), W),
    ])                                                       # (4, WF)

    # Pack 2 samples per step (M = 2*C*H rows for the MXU) only when that
    # still leaves >= 2 grid steps for megacore sharding.
    spb = 2 if (N >= 4 and N % 2 == 0) else 1
    grid = (N // spb,)

    out_r = pl.pallas_call(
        _make_layer_kernel(spb, C, H, WF, _ROLL_SHIFTS_FORWARD),
        out_shape=jax.ShapeDtypeStruct((N, C, H, WF), x.dtype),
        grid=grid,
        in_specs=[
            pl.BlockSpec((spb, C, H, WF), lambda n: (n, 0, 0, 0)),
            # Grid-invariant weights/biases; at this size the default double
            # buffer is ~0.8 MB, negligible — single-buffer when scaling W*F.
            pl.BlockSpec((4, 3 * WF, WF), lambda n: (0, 0, 0)),
            pl.BlockSpec((4, WF), lambda n: (0, 0)),
        ],
        out_specs=pl.BlockSpec((spb, C, H, WF), lambda n: (n, 0, 0, 0)),
        compiler_params=pltpu.CompilerParams(
            dimension_semantics=("parallel",)),
    )(x_r, mats, biases)

    # back to (N, F, C, H, W)
    return jnp.transpose(out_r.reshape(N, C, H, W, F), (0, 4, 1, 2, 3))


# ---------------------------------------------------------------------------
# Pure-JAX reference (for correctness check)
# ---------------------------------------------------------------------------
def layer_reference(params, x):
    N, F, C, H, W = x.shape
    hp = jax.lax.Precision.HIGHEST
    dn = ("NHWC", "HWIO", "NHWC")
    x1 = jnp.transpose(x, (0, 2, 3, 4, 1)).reshape(N * C, H, W, F)
    y = jax.lax.conv_general_dilated(x1, params["w2d_a"], (1, 1), ((1, 1), (1, 1)),
                                     dimension_numbers=dn, precision=hp) + params["b2d_a"]
    y = jnp.maximum(y, 0.0)
    y = jax.lax.conv_general_dilated(y, params["w2d_b"], (1, 1), ((1, 1), (1, 1)),
                                     dimension_numbers=dn, precision=hp) + params["b2d_b"]
    out1 = y + x1
    o1 = out1.reshape(N, C, H * W, F)

    def dconv(xx, w, b):
        xp = jnp.pad(xx, ((0, 0), (1, 1), (0, 0), (0, 0)))
        acc = 0.0
        for dc in range(3):
            acc = acc + jnp.einsum("ncpf,fg->ncpg", xp[:, dc:dc + C], w[dc], precision=hp)
        return acc + b

    z = jnp.maximum(dconv(o1, params["w3d_a"], params["b3d_a"]), 0.0)
    out2 = dconv(z, params["w3d_b"], params["b3d_b"]) + o1
    out = out2.reshape(N, C, H, W, F)
    return jnp.transpose(out, (0, 4, 1, 2, 3))


if __name__ == "__main__":
    key = jax.random.PRNGKey(0)
    k_param, k_x = jax.random.split(key)

    N, n_feats, channels, H, W = 2, 8, 4, 16, 16
    params = init_layer_params(k_param, n_feats)
    x = jax.random.normal(k_x, (N, n_feats, channels, H, W), jnp.float32)

    out = jax.jit(layer_forward)(params, x)
    out = jax.block_until_ready(out)

    ref = layer_reference(params, x)
    assert out.shape == x.shape, (out.shape, x.shape)
    max_err = float(jnp.max(jnp.abs(out - ref)))
    assert jnp.allclose(out, ref, atol=1e-3, rtol=1e-3), f"max abs err = {max_err}"

    print("KERNEL_OK")
</pallas_src>

<mosaic_0001>
module attributes {stable_mosaic.version = 11 : i64} {
  func.func @probe(%arg0: memref<8x128xf32, #tpu.memory_space<vmem>>, %arg1: memref<8x128xf32, #tpu.memory_space<vmem>>) attributes {dimension_semantics = [], scalar_prefetch = 0 : i64, scratch_operands = 0 : i64, tpu.core_type = #tpu.core_type<tc>} {
    %c0 = arith.constant 0 : index
    %c0_0 = arith.constant 0 : index
    %0 = vector.load %arg0[%c0, %c0_0] : memref<8x128xf32, #tpu.memory_space<vmem>>, vector<8x128xf32>
    %c1_i32 = arith.constant 1 : i32
    %1 = tpu.dynamic_rotate %0 by %c1_i32 dim 0 : vector<8x128xf32>, i32 -> vector<8x128xf32>
    %c0_1 = arith.constant 0 : index
    %c0_2 = arith.constant 0 : index
    %2 = vector.load %arg1[%c0_1, %c0_2] : memref<8x128xf32, #tpu.memory_space<vmem>>, vector<8x128xf32>
    tpu.vector_store %arg1[%c0_1, %c0_2], %1 {strides = array<i32>} : memref<8x128xf32, #tpu.memory_space<vmem>>, vector<8x128xf32>,
    return
  }
}

</mosaic_0001>

<llo_original>
// kernel: tpu_custom_call.1
$region0: #{tpu_custom_call.1}
  #allocation0 [shape = 'u32[]', space=smem, size = 0x4, offset = 0x4, fixed_abs, tag = 'smem constant byte address 0x4 - core index']
  #allocation1 [shape = 'u32[72,128]{1,0:T(1,128)}', space=vmem, size = 0x9000, scoped, tag = 'internal scratch']
  %s0 = inlined_call_operand.hbm [shape: f32[8,128], index: 0, kind: input, shape index: {}]
  %s1 = inlined_call_operand.hbm [shape: f32[8,128], index: 1, kind: output, shape index: {}]
  %s2 = sld [smem:[#allocation0]]
  $region18: #{tpu_custom_call.1} parent=0
    _
  %s4 = ssub.s32 1, %s2
  %s5 = scalar_select 0, %s4, %s2
  $region1: #{tpu_custom_call.1} parent=0
    #allocation2 [shape = 'u8[4096]{0}', space=vmem, size = 0x1000, scoped, tag = 'input window, operand 0, single buffered']
    #allocation3 [shape = 's32[1]{0}', space=sflag, size = 0x4, scoped, tag = 'scoped memory for tpu_custom_call.1']
    #allocation4 [shape = 's32[1]{0}', space=sflag, size = 0x4, scoped, tag = 'scoped memory for tpu_custom_call.1']
    #allocation5 [shape = 'u8[4096]{0}', space=vmem, size = 0x1000, scoped, tag = 'output window, operand 0, single buffered']
    %6 = vsyncpa [#allocation3], 0
    %7 = vsyncpa [#allocation4], 0
    // Predicated region
    $region2: #{tpu_custom_call.1} parent=1 // pred_check
      _
    $region3: #{tpu_custom_call.1} parent=1 // pred_check_branch
      %9 = sbr.rel (0) target = $region5
    $region4: #{tpu_custom_call.1} parent=1 // pred_region
      %11 = vsyncadd [#allocation3], 0
      %s13 = sshll.u32 %s0, 4
      %s14 = int_to_ptr.hbm [resolvable:$true] %s13
      %s15 = sshll.u32 [#allocation2], 4
      %s16 = int_to_ptr.vmem [resolvable:$true] %s15
      %18 = dma.hbm_to_vmem [thread:$0]  %s14, 128, %s16, [#allocation3]
    $region5: #{tpu_custom_call.1} parent=1 // pred_fallthru
      _
    // Predicated region
    $region6: #{tpu_custom_call.1} parent=1 // pred_check
      _
    $region7: #{tpu_custom_call.1} parent=1 // pred_check_branch
      %20 = sbr.rel (0) target = $region9
    $region8: #{tpu_custom_call.1} parent=1 // pred_region
      %22 = dma.done [#allocation3], 128
    $region9: #{tpu_custom_call.1} parent=1 // pred_fallthru
      _
    %v23 = vld [vmem:[#allocation2] sm:$0xff]
    %v24 = vrot.slane %v23, 7
    %25 = vst [vmem:[#allocation5] sm:$0xff] %v24
    // Predicated region
    $region10: #{tpu_custom_call.1} parent=1 // pred_check
      _
    $region11: #{tpu_custom_call.1} parent=1 // pred_check_branch
      %27 = sbr.rel (0) target = $region13
    $region12: #{tpu_custom_call.1} parent=1 // pred_region
      %29 = vsyncadd [#allocation4], 0
      %s31 = sshll.u32 [#allocation5], 4
      %s32 = int_to_ptr.vmem [resolvable:$true] %s31
      %s33 = sshll.u32 %s1, 4
      %s34 = int_to_ptr.hbm [resolvable:$true] %s33
      %36 = dma.vmem_to_hbm [thread:$0]  %s32, 128, %s34, [#allocation4]
    $region13: #{tpu_custom_call.1} parent=1 // pred_fallthru
      _
    // Predicated region
    $region14: #{tpu_custom_call.1} parent=1 // pred_check
      _
    $region15: #{tpu_custom_call.1} parent=1 // pred_check_branch
      %38 = sbr.rel (0) target = $region17
    $region16: #{tpu_custom_call.1} parent=1 // pred_region
      %40 = dma.done [#allocation4], 128
    $region17: #{tpu_custom_call.1} parent=1 // pred_fallthru
      _
    %41 = vsyncpa [#allocation3], 1
    %42 = vsyncpa [#allocation4], 1

</llo_original>
